<compile_context>
chip_gen: v6e
topology: v6e:2x2x1
jax: 0.10.0
libtpu: 0.0.40
codegen_flags: <defaults>
</compile_context>

<pallas_src>
import jax
import jax.numpy as jnp
from jax.experimental import pallas as pl
from jax.experimental.pallas import tpu as pltpu

# Small, module-consistent sizes (original: max_length=128, vocab_size=119547).
MAX_LENGTH = 8
VOCAB_SIZE = 256
LENGTH = MAX_LENGTH * VOCAB_SIZE
OUT_FEATURES = 3

# Upper bound on the reduction tile (elements of L per grid step).
TK_MAX = 256 * 1024


def _round_up(a, b):
    return ((a + b - 1) // b) * b


def ffn_kernel(x_ref, w_ref, b_ref, o_ref):
    """One grid step: o += sum_over_tile(W_j * x) for j in 0..2, bias at k==0.

    x_ref: (R, 128) f32        -- lane/sublane-dense x tile
    w_ref: (3, R, 128) f32     -- lane/sublane-dense weight tile
    b_ref: (3, 1) f32          -- bias
    o_ref: (3, 1) f32          -- VMEM-resident accumulator / output
    """
    k = pl.program_id(0)

    @pl.when(k == 0)
    def _():
        # Fold the bias add into the accumulator init.
        o_ref[...] = b_ref[...]

    xv = x_ref[...]  # (R, 128)

    # One VPU multiply + sublane reduce per output feature (XLU slot, cheap);
    # the MXU is skipped on purpose for this degenerate 3-wide contraction.
    rows = [
        jnp.sum(w_ref[j] * xv, axis=0, keepdims=True)  # (1, 128)
        for j in range(OUT_FEATURES)
    ]
    red = jnp.concatenate(rows, axis=0)                 # (3, 128)
    o_ref[...] += jnp.sum(red, axis=1, keepdims=True)   # (3, 1)


def ffn_forward(x, weight, bias, *, tk_max=TK_MAX):
    """x: any shape with L elements; weight: (3, L); bias: (3,). Returns (1, 3)."""
    out_features, length = weight.shape
    assert out_features == OUT_FEATURES

    # Same flattening as torch.reshape(x, (1, length)) (row-major).
    x_flat = jnp.reshape(x, (length,)).astype(jnp.float32)
    weight = weight.astype(jnp.float32)

    # Reduction tiling: one tile if the whole L fits under tk_max (toy case ->
    # grid of 1, zero per-step overhead), otherwise big 256K-element K-tiles.
    tk = min(tk_max, _round_up(length, 128))
    l_pad = _round_up(length, tk)
    num_k = l_pad // tk
    r = tk // 128

    if l_pad != length:
        # Zero padding leaves the dot product unchanged. (Production callers
        # should pick tk dividing L to avoid repadding the weight.)
        x_flat = jnp.pad(x_flat, (0, l_pad - length))
        weight = jnp.pad(weight, ((0, 0), (0, l_pad - length)))

    # Lane/sublane-dense layouts; pure row-major reshapes, no transpose.
    x2 = x_flat.reshape(l_pad // 128, 128)
    w3 = weight.reshape(out_features, l_pad // 128, 128)
    b2 = jnp.reshape(bias, (out_features, 1)).astype(jnp.float32)

    out = pl.pallas_call(
        ffn_kernel,
        out_shape=jax.ShapeDtypeStruct((out_features, 1), jnp.float32),
        grid=(num_k,),
        in_specs=[
            pl.BlockSpec((r, 128), lambda k: (k, 0)),                 # x tile
            pl.BlockSpec((out_features, r, 128), lambda k: (0, k, 0)),  # W tile
            pl.BlockSpec((out_features, 1), lambda k: (0, 0)),          # bias
        ],
        out_specs=pl.BlockSpec((out_features, 1), lambda k: (0, 0)),
        compiler_params=pltpu.CompilerParams(
            dimension_semantics=("arbitrary",),       # reduction axis
            vmem_limit_bytes=32 * 1024 * 1024,        # safe on v5e/v6e/v7x
        ),
    )(x2, w3, b2)

    return out.reshape(1, out_features)


if __name__ == "__main__":
    key = jax.random.PRNGKey(0)
    kx, kw, kb = jax.random.split(key, 3)

    # Input shaped like a (max_length, vocab_size) tensor; the forward pass
    # flattens it to (1, L) just like the PyTorch module.
    x = jax.random.normal(kx, (MAX_LENGTH, VOCAB_SIZE), dtype=jnp.float32)

    # Deterministic Linear(L, 3) parameters (same shapes as nn.Linear).
    bound = 1.0 / (LENGTH ** 0.5)
    weight = jax.random.uniform(
        kw, (OUT_FEATURES, LENGTH), minval=-bound, maxval=bound,
        dtype=jnp.float32)
    bias = jax.random.uniform(
        kb, (OUT_FEATURES,), minval=-bound, maxval=bound, dtype=jnp.float32)

    y = ffn_forward(x, weight, bias)
    y = jax.block_until_ready(y)

    # Pure-JAX reference check.
    y_ref = jnp.reshape(x, (1, LENGTH)) @ weight.T + bias
    assert y.shape == (1, OUT_FEATURES)
    assert jnp.allclose(y, y_ref, atol=1e-4, rtol=1e-4)

    print("KERNEL_OK")
</pallas_src>

<mosaic_0001>
module attributes {stable_mosaic.version = 11 : i64} {
  func.func @ffn_kernel(%arg0: i32, %arg1: memref<16x128xf32, #tpu.memory_space<vmem>>, %arg2: memref<3x16x128xf32, #tpu.memory_space<vmem>>, %arg3: memref<3x1xf32, #tpu.memory_space<vmem>>, %arg4: memref<3x1xf32, #tpu.memory_space<vmem>>) attributes {dimension_semantics = [#tpu.dimension_semantics<arbitrary>], iteration_bounds = array<i64: 1>, scalar_prefetch = 0 : i64, scratch_operands = 0 : i64, tpu.core_type = #tpu.core_type<tc>, window_params = [{transform_indices = @transform_0, window_bounds = array<i64: 16, 128>}, {transform_indices = @transform_1, window_bounds = array<i64: 3, 16, 128>}, {pipeline_mode = #tpu.pipeline_mode<synchronous>, transform_indices = @transform_2, window_bounds = array<i64: 3, 1>}, {pipeline_mode = #tpu.pipeline_mode<synchronous>, transform_indices = @transform_3, window_bounds = array<i64: 3, 1>}]} {
    %c0_i32 = arith.constant 0 : i32
    %0 = arith.cmpi eq, %arg0, %c0_i32 : i32
    %1 = arith.extui %0 : i1 to i32
    %c0_i32_0 = arith.constant 0 : i32
    %2 = arith.cmpi ne, %1, %c0_i32_0 : i32
    scf.if %2 {
      %c0_16 = arith.constant 0 : index
      %c0_17 = arith.constant 0 : index
      %25 = vector.load %arg3[%c0_16, %c0_17] : memref<3x1xf32, #tpu.memory_space<vmem>>, vector<3x1xf32>
      %c0_18 = arith.constant 0 : index
      %c0_19 = arith.constant 0 : index
      %26 = vector.load %arg4[%c0_18, %c0_19] : memref<3x1xf32, #tpu.memory_space<vmem>>, vector<3x1xf32>
      tpu.vector_store %arg4[%c0_18, %c0_19], %25 {strides = array<i32>} : memref<3x1xf32, #tpu.memory_space<vmem>>, vector<3x1xf32>,
    } else {
    }
    %c0 = arith.constant 0 : index
    %c0_1 = arith.constant 0 : index
    %3 = vector.load %arg1[%c0, %c0_1] : memref<16x128xf32, #tpu.memory_space<vmem>>, vector<16x128xf32>
    %c0_2 = arith.constant 0 : index
    %c0_3 = arith.constant 0 : index
    %c0_4 = arith.constant 0 : index
    %4 = vector.load %arg2[%c0_2, %c0_3, %c0_4] : memref<3x16x128xf32, #tpu.memory_space<vmem>>, vector<1x16x128xf32>
    %5 = vector.shape_cast %4 : vector<1x16x128xf32> to vector<16x128xf32>
    %6 = arith.mulf %5, %3 : vector<16x128xf32>
    %cst = arith.constant dense<0.000000e+00> : vector<128xf32>
    %7 = vector.multi_reduction <add>, %6, %cst [0] : vector<16x128xf32> to vector<128xf32>
    %8 = vector.shape_cast %7 : vector<128xf32> to vector<1x128xf32>
    %c1 = arith.constant 1 : index
    %c0_5 = arith.constant 0 : index
    %c0_6 = arith.constant 0 : index
    %9 = vector.load %arg2[%c1, %c0_5, %c0_6] : memref<3x16x128xf32, #tpu.memory_space<vmem>>, vector<1x16x128xf32>
    %10 = vector.shape_cast %9 : vector<1x16x128xf32> to vector<16x128xf32>
    %11 = arith.mulf %10, %3 : vector<16x128xf32>
    %cst_7 = arith.constant dense<0.000000e+00> : vector<128xf32>
    %12 = vector.multi_reduction <add>, %11, %cst_7 [0] : vector<16x128xf32> to vector<128xf32>
    %13 = vector.shape_cast %12 : vector<128xf32> to vector<1x128xf32>
    %c2 = arith.constant 2 : index
    %c0_8 = arith.constant 0 : index
    %c0_9 = arith.constant 0 : index
    %14 = vector.load %arg2[%c2, %c0_8, %c0_9] : memref<3x16x128xf32, #tpu.memory_space<vmem>>, vector<1x16x128xf32>
    %15 = vector.shape_cast %14 : vector<1x16x128xf32> to vector<16x128xf32>
    %16 = arith.mulf %15, %3 : vector<16x128xf32>
    %cst_10 = arith.constant dense<0.000000e+00> : vector<128xf32>
    %17 = vector.multi_reduction <add>, %16, %cst_10 [0] : vector<16x128xf32> to vector<128xf32>
    %18 = vector.shape_cast %17 : vector<128xf32> to vector<1x128xf32>
    %19 = tpu.concatenate %8, %13, %18 in 0 : vector<1x128xf32>, vector<1x128xf32>, vector<1x128xf32> -> vector<3x128xf32>
    %c0_11 = arith.constant 0 : index
    %c0_12 = arith.constant 0 : index
    %20 = vector.load %arg4[%c0_11, %c0_12] : memref<3x1xf32, #tpu.memory_space<vmem>>, vector<3x1xf32>
    %cst_13 = arith.constant dense<0.000000e+00> : vector<3xf32>
    %21 = vector.multi_reduction <add>, %19, %cst_13 [1] : vector<3x128xf32> to vector<3xf32>
    %22 = vector.shape_cast %21 : vector<3xf32> to vector<3x1xf32>
    %23 = arith.addf %20, %22 : vector<3x1xf32>
    %c0_14 = arith.constant 0 : index
    %c0_15 = arith.constant 0 : index
    %24 = vector.load %arg4[%c0_14, %c0_15] : memref<3x1xf32, #tpu.memory_space<vmem>>, vector<3x1xf32>
    tpu.vector_store %arg4[%c0_14, %c0_15], %23 {strides = array<i32>} : memref<3x1xf32, #tpu.memory_space<vmem>>, vector<3x1xf32>,
    return
  }
  func.func @transform_0(%arg0: i32) -> (i32, i32) {
    %c0_i32 = arith.constant 0 : i32
    %c0_i32_0 = arith.constant 0 : i32
    return %arg0, %c0_i32 : i32, i32
  }
  func.func @transform_1(%arg0: i32) -> (i32, i32, i32) {
    %c0_i32 = arith.constant 0 : i32
    %c0_i32_0 = arith.constant 0 : i32
    %c0_i32_1 = arith.constant 0 : i32
    return %c0_i32, %arg0, %c0_i32_0 : i32, i32, i32
  }
  func.func @transform_2(%arg0: i32) -> (i32, i32) {
    %c0_i32 = arith.constant 0 : i32
    %c0_i32_0 = arith.constant 0 : i32
    %c0_i32_1 = arith.constant 0 : i32
    return %c0_i32, %c0_i32_0 : i32, i32
  }
  func.func @transform_3(%arg0: i32) -> (i32, i32) {
    %c0_i32 = arith.constant 0 : i32
    %c0_i32_0 = arith.constant 0 : i32
    %c0_i32_1 = arith.constant 0 : i32
    return %c0_i32, %c0_i32_0 : i32, i32
  }
}

</mosaic_0001>

<llo_original>
// kernel: tpu_custom_call.1
$region0: #{tpu_custom_call.1}
  #allocation0 [shape = 'u32[]', space=smem, size = 0x4, offset = 0x4, fixed_abs, tag = 'smem constant byte address 0x4 - core index']
  #allocation1 [shape = 'u32[144,128]{1,0:T(1,128)}', space=vmem, size = 0x12000, scoped, tag = 'internal scratch']
  %s0 = inlined_call_operand.hbm [shape: f32[16,128], index: 0, kind: input, shape index: {}]
  %s1 = inlined_call_operand.hbm [shape: f32[3,16,128], index: 1, kind: input, shape index: {}]
  %s2 = inlined_call_operand.vmem [shape: f32[3,1], index: 2, kind: input, shape index: {}]
  %s3 = inlined_call_operand.vmem [shape: f32[3,1], index: 3, kind: output, shape index: {}]
  %s4 = sld [smem:[#allocation0]]
  $region34: #{tpu_custom_call.1} parent=0
    _
  %s6 = ssub.s32 1, %s4
  %s7 = scalar_select 0, %s6, %s4
  $region1: #{tpu_custom_call.1} parent=0
    #allocation2 [shape = 'u8[8192]{0}', space=vmem, size = 0x2000, scoped, tag = 'input window, operand 0, single buffered']
    #allocation3 [shape = 's32[1]{0}', space=sflag, size = 0x4, scoped, tag = 'scoped memory for tpu_custom_call.1']
    #allocation4 [shape = 'u8[24576]{0}', space=vmem, size = 0x6000, scoped, tag = 'input window, operand 1, single buffered']
    #allocation5 [shape = 's32[1]{0}', space=sflag, size = 0x4, scoped, tag = 'scoped memory for tpu_custom_call.1']
    %8 = vsyncpa [#allocation3], 0
    %9 = vsyncpa [#allocation5], 0
    // Predicated region
    $region2: #{tpu_custom_call.1} parent=1 // pred_check
      _
    $region3: #{tpu_custom_call.1} parent=1 // pred_check_branch
      %11 = sbr.rel (0) target = $region5
    $region4: #{tpu_custom_call.1} parent=1 // pred_region
      %s13 = ssub.s32 256, 256
      %14 = vsyncadd [#allocation3], %s13
      %s15 = sshll.u32 [#allocation2], 4
      %s16 = int_to_ptr.vmem [resolvable:$true] %s15
      %21 = dma.hbm_to_vmem [thread:$0]  %s0, 256, %s16, [#allocation3], 128, 128, 8
    $region5: #{tpu_custom_call.1} parent=1 // pred_fallthru
      _
    // Predicated region
    $region6: #{tpu_custom_call.1} parent=1 // pred_check
      _
    $region7: #{tpu_custom_call.1} parent=1 // pred_check_branch
      %23 = sbr.rel (0) target = $region9
    $region8: #{tpu_custom_call.1} parent=1 // pred_region
      %s25 = ssub.s32 768, 768
      %26 = vsyncadd [#allocation5], %s25
      %s27 = sshll.u32 [#allocation4], 4
      %s28 = int_to_ptr.vmem [resolvable:$true] %s27
      %33 = dma.hbm_to_vmem [thread:$0]  %s1, 768, %s28, [#allocation5], 128, 128, 8
    $region9: #{tpu_custom_call.1} parent=1 // pred_fallthru
      _
    // Predicated region
    $region10: #{tpu_custom_call.1} parent=1 // pred_check
      _
    $region11: #{tpu_custom_call.1} parent=1 // pred_check_branch
      %35 = sbr.rel (0) target = $region13
    $region12: #{tpu_custom_call.1} parent=1 // pred_region
      _
    $region13: #{tpu_custom_call.1} parent=1 // pred_fallthru
      _
    // Predicated region
    $region14: #{tpu_custom_call.1} parent=1 // pred_check
      _
    $region15: #{tpu_custom_call.1} parent=1 // pred_check_branch
      %37 = sbr.rel (0) target = $region17
    $region16: #{tpu_custom_call.1} parent=1 // pred_region
      %38 = dma.done [#allocation3], 256
    $region17: #{tpu_custom_call.1} parent=1 // pred_fallthru
      _
    // Predicated region
    $region18: #{tpu_custom_call.1} parent=1 // pred_check
      _
    $region19: #{tpu_custom_call.1} parent=1 // pred_check_branch
      %40 = sbr.rel (0) target = $region21
    $region20: #{tpu_custom_call.1} parent=1 // pred_region
      %41 = dma.done [#allocation5], 768
    $region21: #{tpu_custom_call.1} parent=1 // pred_fallthru
      _
    %p42 = scmp.eq.s32.totalorder 0, 0
    // Predicated region
    $region22: #{tpu_custom_call.1} parent=1 // pred_check
      %p43 = pneg %p42
    $region23: #{tpu_custom_call.1} parent=1 // pred_check_branch
      %45 = sbr.rel (%p43) target = $region25
    $region24: #{tpu_custom_call.1} parent=1 // pred_region
      %v46 = vld [vmem:[%s2] sm:$0x7]
      %vm47 = vcmask 2048
      %48 = vst.msk [vmem:[%s3] sm:$0x7] %vm47, %v46
    $region25: #{tpu_custom_call.1} parent=1 // pred_fallthru
      _
    %v49 = vld [vmem:[#allocation2] sm:$0xff]
    %v50 = vld [vmem:[#allocation2 + $0x8] sm:$0xff]
    %v51 = vld [vmem:[#allocation4] sm:$0xff]
    %v52 = vld [vmem:[#allocation4 + $0x8] sm:$0xff]
    %v53 = vmul.f32 %v51, %v49
    %v54 = vmul.f32 %v52, %v50
    %v55 = vadd.f32 %v53, %v54
    %v56 = vrot.slane %v55, 4
    %v57 = vadd.f32 %v55, %v56
    %v58 = vrot.slane %v57, 2
    %v59 = vadd.f32 %v57, %v58
    %v60 = vrot.slane %v59, 1
    %v61 = vadd.f32 %v59, %v60
    %s62 = scalar_lea.vmem [#allocation4], 16
    %v63 = vld [vmem:[%s62] sm:$0xff]
    %v64 = vld [vmem:[%s62 + $0x8] sm:$0xff]
    %v65 = vmul.f32 %v63, %v49
    %v66 = vmul.f32 %v64, %v50
    %v67 = vadd.f32 %v65, %v66
    %v68 = vrot.slane %v67, 4
    %v69 = vadd.f32 %v67, %v68
    %v70 = vrot.slane %v69, 2
    %v71 = vadd.f32 %v69, %v70
    %v72 = vrot.slane %v71, 1
    %v73 = vadd.f32 %v71, %v72
    %s74 = scalar_lea.vmem [#allocation4], 32
    %v75 = vld [vmem:[%s74] sm:$0xff]
    %v76 = vld [vmem:[%s74 + $0x8] sm:$0xff]
    %v77 = vmul.f32 %v75, %v49
    %v78 = vmul.f32 %v76, %v50
    %v79 = vadd.f32 %v77, %v78
    %v80 = vrot.slane %v79, 4
    %v81 = vadd.f32 %v79, %v80
    %v82 = vrot.slane %v81, 2
    %v83 = vadd.f32 %v81, %v82
    %v84 = vrot.slane %v83, 1
    %v85 = vadd.f32 %v83, %v84
    %vm86 = vcmask 1040384
    %v87 = vsel %vm86, %v61, %v73
    %vm88 = vcmask 1041408
    %v89 = vsel %vm88, %v87, %v85
    %v90 = vld [vmem:[%s3] sm:$0x7]
    %vm91 = vcmask 1042432
    %v92 = vsel %vm91, %v89, 0.0
    %93 = vadd.xlane.f32.xlu0 %v92
    %v94 = vpop.xlane.xlu0 %93
    %v95 = vadd.f32 %v90, %v94
    %vm96 = vcmask 2048
    %97 = vst.msk [vmem:[%s3] sm:$0x7] %vm96, %v95
    // Predicated region
    $region26: #{tpu_custom_call.1} parent=1 // pred_check
      _
    $region27: #{tpu_custom_call.1} parent=1 // pred_check_branch
      %99 = sbr.rel (0) target = $region29
    $region28: #{tpu_custom_call.1} parent=1 // pred_region
      _
    $region29: #{tpu_custom_call.1} parent=1 // pred_fallthru
      _
    // Predicated region
    $region30: #{tpu_custom_call.1} parent=1 // pred_check
      _
    $region31: #{tpu_custom_call.1} parent=1 // pred_check_branch
      %101 = sbr.rel (0) target = $region33
    $region32: #{tpu_custom_call.1} parent=1 // pred_region
      _
    $region33: #{tpu_custom_call.1} parent=1 // pred_fallthru
      _
    %102 = vsyncpa [#allocation3], 1
    %103 = vsyncpa [#allocation5], 1

</llo_original>
